<compile_context>
chip_gen: v7x
topology: tpu7x:2x2x1
jax: 0.10.0
libtpu: 0.0.40
codegen_flags: <defaults>
</compile_context>

<pallas_src>
import math

import numpy as np
import jax
import jax.numpy as jnp
from jax import lax
from jax.experimental import pallas as pl
from jax.experimental.pallas import tpu as pltpu

_MIB = 1024 * 1024


def _vmem_limit(block_bytes):
    # Explicit scoped-VMEM limit: 2x headroom over the live block bytes,
    # floored at the v6e/v7x default (32 MiB), capped at 64 MiB (v7x physical).
    return int(min(max(2 * block_bytes, 32 * _MIB), 64 * _MIB))


# ----------------------------- linear (tiled) --------------------------------

def linear_kernel(x_ref, w_ref, b_ref, o_ref):
    # x: (tm, Din) input dtype, w: (Din, tn) bf16 (no per-step cast), b: (1, tn) bf16.
    x = x_ref[...].astype(jnp.bfloat16)
    acc = jnp.dot(x, w_ref[...], preferred_element_type=jnp.float32)
    o_ref[...] = (acc + b_ref[...].astype(jnp.float32)).astype(o_ref.dtype)


def linear(x2d, w_bf16, b_bf16, *, out_dtype=jnp.bfloat16,
           block_rows=256, block_cols=512):
    """x2d: (N, Din); w: (Din, Dout) bf16; b: (Dout,) bf16 -> (N, Dout) out_dtype."""
    N, Din = x2d.shape
    Dout = w_bf16.shape[1]
    tm = N if N <= block_rows else block_rows        # full-dim or 8-multiple
    tn = Dout if Dout <= block_cols else block_cols  # full-dim or 128-multiple
    grid = (pl.cdiv(N, tm), pl.cdiv(Dout, tn))

    x_bytes = np.dtype(x2d.dtype).itemsize
    out_bytes = np.dtype(out_dtype).itemsize
    block_bytes = 2 * (tm * Din * x_bytes     # x row tile (double-buffered)
                       + Din * tn * 2         # weight column tile (bf16)
                       + tn * 2               # bias tile
                       + tm * tn * out_bytes)  # output tile
    cost = pl.CostEstimate(
        flops=2 * N * Din * Dout,
        transcendentals=0,
        bytes_accessed=(N * Din * x_bytes + Din * Dout * 2 + Dout * 2
                        + N * Dout * out_bytes),
    )
    return pl.pallas_call(
        linear_kernel,
        out_shape=jax.ShapeDtypeStruct((N, Dout), out_dtype),
        grid=grid,
        in_specs=[
            pl.BlockSpec((tm, Din), lambda i, j: (i, 0)),   # row tile (resident over j)
            pl.BlockSpec((Din, tn), lambda i, j: (0, j)),   # weight column tile, streamed
            pl.BlockSpec((1, tn), lambda i, j: (0, j)),     # bias column tile
        ],
        out_specs=pl.BlockSpec((tm, tn), lambda i, j: (i, j)),
        compiler_params=pltpu.CompilerParams(
            dimension_semantics=("parallel", "parallel"),
            vmem_limit_bytes=_vmem_limit(block_bytes)),
        cost_estimate=cost,
    )(x2d, w_bf16, b_bf16.reshape(1, Dout))


# ------------------------- flash-style attention -----------------------------

def flash_attn_kernel(q_ref, k_ref, v_ref, o_ref, m_sc, l_sc, acc_sc):
    kv = pl.program_id(2)

    @pl.when(kv == 0)
    def _():
        m_sc[...] = jnp.full_like(m_sc, -jnp.inf)
        l_sc[...] = jnp.zeros_like(l_sc)
        acc_sc[...] = jnp.zeros_like(acc_sc)

    q = q_ref[0]        # (tq, hd) bf16; attention scale already folded into Wq/bq
    k = k_ref[0]        # (tkv, hd) bf16
    v = v_ref[0]        # (tkv, hd) bf16

    # Scores: contract the minor dim of both operands -> no XLU transpose of K.
    s = lax.dot_general(q, k, (((1,), (1,)), ((), ())),
                        preferred_element_type=jnp.float32)       # (tq, tkv) f32

    m_prev = m_sc[...]
    m_new = jnp.maximum(m_prev, jnp.max(s, axis=-1, keepdims=True))
    alpha = jnp.exp(m_prev - m_new)
    p = jnp.exp(s - m_new)                                        # unnormalized
    l_sc[...] = alpha * l_sc[...] + jnp.sum(p, axis=-1, keepdims=True)
    acc_sc[...] = alpha * acc_sc[...] + jnp.dot(
        p.astype(jnp.bfloat16), v, preferred_element_type=jnp.float32)
    m_sc[...] = m_new

    @pl.when(kv == pl.num_programs(2) - 1)
    def _():
        # Normalize AFTER the PV matmul: (tq, hd) multiply instead of (tq, tkv).
        o_ref[0] = (acc_sc[...] *
                    pl.reciprocal(l_sc[...], approx=True)).astype(o_ref.dtype)


def attention(q3, k3, v3, *, block_q=256, block_kv=256, out_dtype=jnp.bfloat16):
    """q3/k3/v3: (B*H, S, hd) bf16 (raw-reshape head grouping) -> (B*H, S, hd)."""
    BH, S, hd = q3.shape
    tq = S if S <= block_q else block_q
    tkv = S if S <= block_kv else block_kv
    # TODO(synk): mask ragged Q/KV tiles; for now require even tiling.
    assert S % tq == 0 and S % tkv == 0
    grid = (BH, S // tq, S // tkv)

    qspec = pl.BlockSpec((1, tq, hd), lambda b, i, k: (b, i, 0))
    kvspec = pl.BlockSpec((1, tkv, hd), lambda b, i, k: (b, k, 0))
    ospec = pl.BlockSpec((1, tq, hd), lambda b, i, k: (b, i, 0))

    block_bytes = (2 * (tq * hd * 2 + 2 * tkv * hd * 2 + tq * hd * 2)  # q,k,v,out
                   + 2 * tq * 4 + tq * hd * 4)                         # m,l,acc scratch
    cost = pl.CostEstimate(
        flops=4 * BH * S * S * hd,
        transcendentals=BH * S * S,
        bytes_accessed=2 * 4 * BH * S * hd,      # bf16 q,k,v,out
    )
    # TODO(synk): with hd < 128 the output stores are lane-sparse (masked
    # vst.msk); pack several heads into a >=128-lane minor slab if this
    # epilogue ever becomes store-bound.
    return pl.pallas_call(
        flash_attn_kernel,
        out_shape=jax.ShapeDtypeStruct((BH, S, hd), out_dtype),
        grid=grid,
        in_specs=[qspec, kvspec, kvspec],
        out_specs=ospec,
        scratch_shapes=[
            pltpu.VMEM((tq, 1), jnp.float32),    # running max
            pltpu.VMEM((tq, 1), jnp.float32),    # running sum
            pltpu.VMEM((tq, hd), jnp.float32),   # output accumulator
        ],
        compiler_params=pltpu.CompilerParams(
            dimension_semantics=("parallel", "parallel", "arbitrary"),
            vmem_limit_bytes=_vmem_limit(block_bytes)),
        cost_estimate=cost,
    )(q3, k3, v3)


# ------------------------------ module wrapper --------------------------------

class MultiHeadAttentionPallas:
    def __init__(self, input_size, num_heads, key):
        assert input_size % num_heads == 0
        self.num_heads = num_heads
        self.head_size = input_size // num_heads
        self.input_size = input_size
        D = input_size
        ks = jax.random.split(key, 8)

        def xavier(k):
            # torch.nn.init.xavier_uniform_ for a (D, D) weight; stored
            # pre-transposed as (in, out) for x @ w.
            bound = math.sqrt(6.0 / (D + D))
            return jax.random.uniform(k, (D, D), jnp.float32, -bound, bound)

        def bias(k):
            # nn.Linear default bias init: U(-1/sqrt(fan_in), 1/sqrt(fan_in)).
            bound = 1.0 / math.sqrt(D)
            return jax.random.uniform(k, (D,), jnp.float32, -bound, bound)

        wq, wk, wv = xavier(ks[0]), xavier(ks[2]), xavier(ks[4])
        bq, bk, bv = bias(ks[1]), bias(ks[3]), bias(ks[5])
        inv_scale = 1.0 / math.sqrt(self.head_size)
        # Fused QKV weight/bias stored in bf16, with the 1/sqrt(head_size)
        # attention scale folded into the Q projection.
        self.w_qkv = jnp.concatenate(
            [wq * inv_scale, wk, wv], axis=1).astype(jnp.bfloat16)   # (D, 3D)
        self.b_qkv = jnp.concatenate(
            [bq * inv_scale, bk, bv]).astype(jnp.bfloat16)           # (3D,)
        self.w_o = xavier(ks[6]).astype(jnp.bfloat16)
        self.b_o = bias(ks[7]).astype(jnp.bfloat16)

    def __call__(self, inputs):
        # inputs: (B, S, D) f32
        B, S, D = inputs.shape
        H, hd = self.num_heads, self.head_size
        x2d = inputs.reshape(B * S, D)

        # Fused QKV projection; bf16 activations halve downstream DMA/relayout.
        qkv = linear(x2d, self.w_qkv, self.b_qkv, out_dtype=jnp.bfloat16)
        q, k, v = jnp.split(qkv, 3, axis=-1)

        # Raw row-major reshape == torch's .view(B*H, -1, head_size).
        # TODO(synk): emit q/k/v directly in (B*H, S, hd) layout from the
        # projection kernel's out_specs to avoid this relayout copy entirely.
        q = q.reshape(B * H, S, hd)
        k = k.reshape(B * H, S, hd)
        v = v.reshape(B * H, S, hd)

        att = attention(q, k, v, out_dtype=jnp.bfloat16)     # (B*H, S, hd)

        # == torch's .view(B, -1, input_size) followed by the output Linear.
        out = linear(att.reshape(B * S, D), self.w_o, self.b_o,
                     out_dtype=jnp.float32)
        return out.reshape(B, S, D)


# Pure-JAX reference mirroring the kernel's numerics (bf16 MXU operands, f32
# accumulation, post-PV normalization).  Correctness check only.
def reference_forward(mod, inputs):
    B, S, D = inputs.shape
    H, hd = mod.num_heads, mod.head_size

    x2d = inputs.reshape(B * S, D)
    qkv = (jnp.dot(x2d.astype(jnp.bfloat16), mod.w_qkv,
                   preferred_element_type=jnp.float32)
           + mod.b_qkv.astype(jnp.float32))
    q, k, v = jnp.split(qkv, 3, axis=-1)
    q = q.reshape(B * H, S, hd).astype(jnp.bfloat16)   # scale folded into Wq/bq
    k = k.reshape(B * H, S, hd).astype(jnp.bfloat16)
    v = v.reshape(B * H, S, hd).astype(jnp.bfloat16)
    s = jnp.einsum("bqd,bkd->bqk", q, k, preferred_element_type=jnp.float32)
    m = jnp.max(s, axis=-1, keepdims=True)
    p = jnp.exp(s - m)
    denom = jnp.sum(p, axis=-1, keepdims=True)
    pv = jnp.einsum("bqk,bkd->bqd", p.astype(jnp.bfloat16), v,
                    preferred_element_type=jnp.float32)
    att = (pv / denom).astype(jnp.bfloat16)
    out = (jnp.dot(att.reshape(B * S, D), mod.w_o,
                   preferred_element_type=jnp.float32)
           + mod.b_o.astype(jnp.float32))
    return out.reshape(B, S, D)


if __name__ == "__main__":
    key = jax.random.PRNGKey(0)
    k_param, k_x = jax.random.split(key)

    batch, seq, input_size, num_heads = 2, 8, 32, 4
    mod = MultiHeadAttentionPallas(input_size, num_heads, k_param)
    x = jax.random.normal(k_x, (batch, seq, input_size), jnp.float32)

    out = jax.block_until_ready(mod(x))
    assert out.shape == (batch, seq, input_size)

    ref = reference_forward(mod, x)
    max_err = float(jnp.max(jnp.abs(out - ref)))
    assert jnp.allclose(out, ref, atol=2e-2, rtol=2e-2), max_err

    print("KERNEL_OK")
</pallas_src>

<mosaic_0001>
module attributes {stable_mosaic.version = 11 : i64} {
  func.func @linear_kernel(%arg0: i32, %arg1: i32, %arg2: memref<16x32xf32, #tpu.memory_space<vmem>>, %arg3: memref<32x96xbf16, #tpu.memory_space<vmem>>, %arg4: memref<1x96xbf16, #tpu.memory_space<vmem>>, %arg5: memref<16x96xbf16, #tpu.memory_space<vmem>>) attributes {dimension_semantics = [#tpu.dimension_semantics<parallel>, #tpu.dimension_semantics<parallel>], iteration_bounds = array<i64: 1, 1>, scalar_prefetch = 0 : i64, scratch_operands = 0 : i64, tpu.core_type = #tpu.core_type<tc>, window_params = [{transform_indices = @transform_0, window_bounds = array<i64: 16, 32>}, {transform_indices = @transform_1, window_bounds = array<i64: 32, 96>}, {transform_indices = @transform_2, window_bounds = array<i64: 1, 96>}, {transform_indices = @transform_3, window_bounds = array<i64: 16, 96>}]} {
    %c0 = arith.constant 0 : index
    %c0_0 = arith.constant 0 : index
    %0 = vector.load %arg2[%c0, %c0_0] : memref<16x32xf32, #tpu.memory_space<vmem>>, vector<16x32xf32>
    %1 = arith.truncf %0 : vector<16x32xf32> to vector<16x32xbf16>
    %c0_1 = arith.constant 0 : index
    %c0_2 = arith.constant 0 : index
    %2 = vector.load %arg3[%c0_1, %c0_2] : memref<32x96xbf16, #tpu.memory_space<vmem>>, vector<32x96xbf16>
    %cst = arith.constant dense<0.000000e+00> : vector<16x96xf32>
    %3 = tpu.matmul %1, %2, %cst {dimension_numbers = #tpu.dot_dimension_numbers<[1], [0], [0], [1], [0, 0, 1, 1], [], []>} : vector<16x32xbf16>, vector<32x96xbf16>, vector<16x96xf32> -> vector<16x96xf32>
    %c0_3 = arith.constant 0 : index
    %c0_4 = arith.constant 0 : index
    %4 = vector.load %arg4[%c0_3, %c0_4] : memref<1x96xbf16, #tpu.memory_space<vmem>>, vector<1x96xbf16>
    %5 = arith.extf %4 : vector<1x96xbf16> to vector<1x96xf32>
    %6 = vector.broadcast %5 : vector<1x96xf32> to vector<16x96xf32>
    %7 = arith.addf %3, %6 : vector<16x96xf32>
    %8 = arith.truncf %7 : vector<16x96xf32> to vector<16x96xbf16>
    %c0_5 = arith.constant 0 : index
    %c0_6 = arith.constant 0 : index
    %9 = vector.load %arg5[%c0_5, %c0_6] : memref<16x96xbf16, #tpu.memory_space<vmem>>, vector<16x96xbf16>
    tpu.vector_store %arg5[%c0_5, %c0_6], %8 {strides = array<i32>} : memref<16x96xbf16, #tpu.memory_space<vmem>>, vector<16x96xbf16>,
    return
  }
  func.func @transform_0(%arg0: i32, %arg1: i32) -> (i32, i32) {
    %c0_i32 = arith.constant 0 : i32
    %c0_i32_0 = arith.constant 0 : i32
    return %arg0, %c0_i32 : i32, i32
  }
  func.func @transform_1(%arg0: i32, %arg1: i32) -> (i32, i32) {
    %c0_i32 = arith.constant 0 : i32
    %c0_i32_0 = arith.constant 0 : i32
    return %c0_i32, %arg1 : i32, i32
  }
  func.func @transform_2(%arg0: i32, %arg1: i32) -> (i32, i32) {
    %c0_i32 = arith.constant 0 : i32
    %c0_i32_0 = arith.constant 0 : i32
    return %c0_i32, %arg1 : i32, i32
  }
  func.func @transform_3(%arg0: i32, %arg1: i32) -> (i32, i32) {
    %c0_i32 = arith.constant 0 : i32
    return %arg0, %arg1 : i32, i32
  }
}

</mosaic_0001>

<llo_original>
// kernel: tpu_custom_call.1
$region0: #{tpu_custom_call.1}
  #allocation0 [shape = 'u32[]', space=smem, size = 0x4, offset = 0x4, fixed_abs, tag = 'smem constant byte address 0x4 - core index']
  #allocation1 [shape = 'u32[144,128]{1,0:T(1,128)}', space=vmem, size = 0x12000, scoped, tag = 'internal scratch']
  %s0 = inlined_call_operand.hbm [shape: f32[16,32], index: 0, kind: input, shape index: {}]
  %s1 = inlined_call_operand.hbm [shape: bf16[32,96], index: 1, kind: input, shape index: {}]
  %s2 = inlined_call_operand.vmem [shape: bf16[1,96], index: 2, kind: input, shape index: {}]
  %s3 = inlined_call_operand.hbm [shape: bf16[16,96], index: 3, kind: output, shape index: {}]
  %s4 = sld [smem:[#allocation0]]
  $region30: #{tpu_custom_call.1} parent=0
    _
  %s6 = ssub.s32 1, %s4
  %s7 = scalar_select 0, %s6, %s4
  $region1: #{tpu_custom_call.1} parent=0
    #allocation2 [shape = 'u8[8192]{0}', space=vmem, size = 0x2000, scoped, tag = 'input window, operand 0, single buffered']
    #allocation3 [shape = 's32[1]{0}', space=sflag, size = 0x4, scoped, tag = 'scoped memory for tpu_custom_call.1']
    #allocation4 [shape = 's32[1]{0}', space=sflag, size = 0x4, scoped, tag = 'scoped memory for tpu_custom_call.1']
    #allocation5 [shape = 'u8[8192]{0}', space=vmem, size = 0x2000, scoped, tag = 'input window, operand 1, single buffered']
    #allocation6 [shape = 's32[1]{0}', space=sflag, size = 0x4, scoped, tag = 'scoped memory for tpu_custom_call.1']
    #allocation7 [shape = 'u8[4096]{0}', space=vmem, size = 0x1000, scoped, tag = 'output window, operand 0, single buffered']
    %8 = vsyncpa [#allocation3], 0
    %9 = vsyncpa [#allocation6], 0
    %10 = vsyncpa [#allocation4], 0
    // Predicated region
    $region2: #{tpu_custom_call.1} parent=1 // pred_check
      _
    $region3: #{tpu_custom_call.1} parent=1 // pred_check_branch
      %12 = sbr.rel (0) target = $region5
    $region4: #{tpu_custom_call.1} parent=1 // pred_region
      %s14 = ssub.s32 256, 256
      %15 = vsyncadd [#allocation3], %s14
      %s16 = sshll.u32 [#allocation2], 4
      %s17 = int_to_ptr.vmem [resolvable:$true] %s16
      %22 = dma.hbm_to_vmem [thread:$0]  %s0, 256, %s17, [#allocation3], 128, 128, 8
    $region5: #{tpu_custom_call.1} parent=1 // pred_fallthru
      _
    // Predicated region
    $region6: #{tpu_custom_call.1} parent=1 // pred_check
      _
    $region7: #{tpu_custom_call.1} parent=1 // pred_check_branch
      %24 = sbr.rel (0) target = $region9
    $region8: #{tpu_custom_call.1} parent=1 // pred_region
      %s26 = ssub.s32 256, 256
      %27 = vsyncadd [#allocation6], %s26
      %s28 = sshll.u32 [#allocation5], 4
      %s29 = int_to_ptr.vmem [resolvable:$true] %s28
      %34 = dma.hbm_to_vmem [thread:$0]  %s1, 256, %s29, [#allocation6], 64, 64, 4
    $region9: #{tpu_custom_call.1} parent=1 // pred_fallthru
      _
    // Predicated region
    $region10: #{tpu_custom_call.1} parent=1 // pred_check
      _
    $region11: #{tpu_custom_call.1} parent=1 // pred_check_branch
      %36 = sbr.rel (0) target = $region13
    $region12: #{tpu_custom_call.1} parent=1 // pred_region
      _
    $region13: #{tpu_custom_call.1} parent=1 // pred_fallthru
      _
    // Predicated region
    $region14: #{tpu_custom_call.1} parent=1 // pred_check
      _
    $region15: #{tpu_custom_call.1} parent=1 // pred_check_branch
      %38 = sbr.rel (0) target = $region17
    $region16: #{tpu_custom_call.1} parent=1 // pred_region
      %39 = dma.done [#allocation3], 256
    $region17: #{tpu_custom_call.1} parent=1 // pred_fallthru
      _
    // Predicated region
    $region18: #{tpu_custom_call.1} parent=1 // pred_check
      _
    $region19: #{tpu_custom_call.1} parent=1 // pred_check_branch
      %41 = sbr.rel (0) target = $region21
    $region20: #{tpu_custom_call.1} parent=1 // pred_region
      %42 = dma.done [#allocation6], 256
    $region21: #{tpu_custom_call.1} parent=1 // pred_fallthru
      _
    %v44 = vld [vmem:[#allocation2] sm:$0xff]
    %v45 = vld [vmem:[#allocation2 + $0x8] sm:$0xff]
    %v46 = vpack.c.bf16 %v45, %v44
    %v47 = vld [vmem:[#allocation5] sm:$0xf]
    %v48 = vld [vmem:[#allocation5 + $0x4] sm:$0xf]
    %v49 = vld [vmem:[#allocation5 + $0x8] sm:$0xf]
    %v50 = vld [vmem:[#allocation5 + $0xc] sm:$0xf]
    %v51 = vld [vmem:[%s2] sm:$0x1]
    %v52 = vunpack.c.l.bf16 %v51
    %v53 = vlaneseq
    %v54 = vshrl.u32 %v53, 7
    %v55 = vsub.s32 0, %v54
    %v56 = vrot.slane %v52, %v55
    %v61 = vunpack.c.l.b16 %v47
    %v62 = vunpack.c.l.b16 %v48
    %v63 = vunpack.c.l.b16 %v49
    %v64 = vunpack.c.l.b16 %v50
    %v65 = vpack.c.b16 %v62, %v61
    %v66 = vpack.c.b16 %v64, %v63
    %vm69 = vcmask 261120
    %v71 = vsel %vm69, %v46, 0
    %73 = vmatprep.subr.bf16.mxu0 0
    %74 = vmatpush1.bf16.msra.mxu0 %v65
    %75 = vmatprep.subr.bf16.mxu0 0
    %76 = vmatpush1.bf16.msra.mxu0 %v66
    %77 = vmatprep.subr.bf16.mxu0 0
    %78 = vmatpush1.bf16.msra.mxu0 0
    %79 = vmatprep.subr.bf16.mxu0 0
    %80 = vmatpush1.bf16.msra.mxu0 0
    %81 = vmatprep.subr.bf16.mxu0 0
    %82 = vmatpush1.bf16.msra.mxu0 0
    %83 = vmatprep.subr.bf16.mxu0 0
    %84 = vmatpush1.bf16.msra.mxu0 0
    %85 = vmatprep.subr.bf16.mxu0 0
    %86 = vmatpush1.bf16.msra.mxu0 0
    %87 = vmatprep.subr.bf16.mxu0 0
    %88 = vmatpush1.bf16.msra.mxu0 0
    %89 = vmatprep.subr.bf16.mxu0 0
    %90 = vmatpush1.bf16.msra.mxu0 0
    %91 = vmatprep.subr.bf16.mxu0 0
    %92 = vmatpush1.bf16.msra.mxu0 0
    %93 = vmatprep.subr.bf16.mxu0 0
    %94 = vmatpush1.bf16.msra.mxu0 0
    %95 = vmatprep.subr.bf16.mxu0 0
    %96 = vmatpush1.bf16.msra.mxu0 0
    %97 = vmatprep.subr.bf16.mxu0 0
    %98 = vmatpush1.bf16.msra.mxu0 0
    %99 = vmatprep.subr.bf16.mxu0 0
    %100 = vmatpush1.bf16.msra.mxu0 0
    %101 = vmatprep.subr.bf16.mxu0 0
    %102 = vmatpush1.bf16.msra.mxu0 0
    %103 = vmatprep.subr.bf16.mxu0 0
    %104 = vmatpush1.bf16.msra.mxu0 0
    %105 = vmatprep.mubr.bf16.mxu0 0
    %106 = vmatmul.mubr.bf16.gmra.mrb[0].mxu0 %v71
    %v107 = vpop.f32.mrb[0].mxu0
    %v108 = vadd.f32 %v56, %v107
    %v109 = vpop.f32.mrb[0].mxu0
    %v110 = vpop.f32.mrb[0].mxu0
    %v111 = vadd.f32 %v56, %v110
    %v112 = vpop.f32.mrb[0].mxu0
    %113 = vdwg.mxu0
    %v114 = vpack.c.bf16 %v111, %v108
    %v116 = vunpack.c.l.b16 %v114
    %v117 = vunpack.c.h.b16 %v114
    %v118 = vpack.c.b16 %v116, %v116
    %v119 = vpack.c.b16 %v117, %v117
    %vm122 = vcmask 781312
    %123 = vst.msk [vmem:[#allocation7] sm:$0xf] %vm122, %v118
    %124 = vst.msk [vmem:[#allocation7 + $0x4] sm:$0xf] %vm122, %v119
    // Predicated region
    $region22: #{tpu_custom_call.1} parent=1 // pred_check
      _
    $region23: #{tpu_custom_call.1} parent=1 // pred_check_branch
      %126 = sbr.rel (0) target = $region25
    $region24: #{tpu_custom_call.1} parent=1 // pred_region
      %s128 = ssub.s32 128, 128
      %129 = vsyncadd [#allocation4], %s128
      %s130 = sshll.u32 [#allocation7], 4
      %s131 = int_to_ptr.vmem [resolvable:$true] %s130
      %136 = dma.vmem_to_hbm [thread:$0]  %s131, 128, %s3, [#allocation4], 64, 64, 4
    $region25: #{tpu_custom_call.1} parent=1 // pred_fallthru
      _
    // Predicated region
    $region26: #{tpu_custom_call.1} parent=1 // pred_check
      _
    $region27: #{tpu_custom_call.1} parent=1 // pred_check_branch
      %138 = sbr.rel (0) target = $region29
    $region28: #{tpu_custom_call.1} parent=1 // pred_region
      %139 = dma.done [#allocation4], 128
    $region29: #{tpu_custom_call.1} parent=1 // pred_fallthru
      _
    %140 = vsyncpa [#allocation3], 1
    %141 = vsyncpa [#allocation6], 1
    %142 = vsyncpa [#allocation4], 1

</llo_original>
